<compile_context>
chip_gen: v7x
topology: tpu7x:2x2x1
jax: 0.10.0
libtpu: 0.0.40
codegen_flags: <defaults>
</compile_context>

<pallas_src>
import jax
import jax.numpy as jnp
from jax import lax
from jax.experimental import pallas as pl
from jax.experimental.pallas import tpu as pltpu


def final_layer_kernel(x_ref, scale1_ref, wlin_ref, bias_ref, o_ref):
    """One (batch, token-tile) step: LayerNorm -> scale -> final linear (+fused bias)."""
    x = x_ref[0].astype(jnp.float32)                         # (TQ, H)
    h = x.shape[-1]
    inv_h = 1.0 / h

    # --- two-pass LayerNorm (no affine, eps=1e-6), stats in f32 ---
    mean = jnp.sum(x, axis=-1, keepdims=True) * inv_h
    xc = x - mean
    var = jnp.sum(xc * xc, axis=-1, keepdims=True) * inv_h
    x_n = xc * lax.rsqrt(var + 1e-6)                         # (TQ, H)

    # --- modulate: shift is already folded into the bias, only scale remains ---
    scale1 = scale1_ref[0].astype(jnp.float32)               # (1, H) = 1 + scale
    x_m = x_n * scale1                                       # (TQ, H)

    # --- final linear on the MXU: bf16 operands, f32 accumulation, lane-dense out ---
    out = jnp.dot(x_m.astype(jnp.bfloat16), wlin_ref[...],
                  preferred_element_type=jnp.float32)        # (TQ, O_pad)
    out = out + bias_ref[0]                                  # (1, O_pad) broadcast
    o_ref[0] = out.astype(o_ref.dtype)


def _pick_token_tile(T, B, H, O_pad, x_itemsize, out_itemsize,
                     target=512, vmem_budget=24 * 1024 * 1024):
    """Token tile: as large as possible (<= target), multiple of 8 (or the full T),
    clamped to a VMEM budget (keeps v7x's 64 MiB happy and the pipeline
    double-buffered), and small enough that a v7x megacore gets >= 2 grid steps."""
    tq = T if T <= target else (target // 8) * 8

    def vmem_need(t):
        return (2 * t * H * x_itemsize            # x tile (double-buffered)
                + 2 * t * O_pad * out_itemsize    # output tile (double-buffered)
                + 2 * H * O_pad * 2               # bf16 weight
                + 2 * H * 4 + 2 * O_pad * 4)      # scale1 + fused bias

    while tq > 8 and vmem_need(tq) > vmem_budget:
        tq = max(8, ((tq // 2) // 8) * 8)

    # v7x has 2 TensorCores: make sure the (parallel) grid has >= 2 steps.
    if T > 8 and B * ((T + tq - 1) // tq) < 2:
        tq = min(tq, ((((T + 1) // 2) + 7) // 8) * 8)
    return tq


def final_layer(x, c, w_mod, b_mod, w_lin, b_lin):
    B, T, H = x.shape
    O = w_lin.shape[1]
    out_dtype = x.dtype

    # --- adaLN branch hoisted out of the kernel (plain XLA, tiny) ---
    c32 = c.astype(jnp.float32)
    silu_c = c32 * jax.nn.sigmoid(c32)
    mod = silu_c @ w_mod.astype(jnp.float32) + b_mod.astype(jnp.float32)   # (B, 2H)
    shift, scale = mod[:, :H], mod[:, H:]                                  # (B, H)

    # Fold shift into a per-batch bias; precompute 1 + scale.
    w_lin32 = w_lin.astype(jnp.float32)
    bias_b = shift @ w_lin32 + b_lin.astype(jnp.float32).reshape(1, O)     # (B, O)
    scale1 = (1.0 + scale).reshape(B, 1, H)                                # (B, 1, H)

    # Lane-dense output width (pad only when needed; skip padding + slice if O%128==0).
    pad = (-O) % 128
    O_pad = O + pad
    w_lin_bf16 = w_lin.astype(jnp.bfloat16)
    if pad:
        w_lin_p = jnp.pad(w_lin_bf16, ((0, 0), (0, pad)))
        bias_p = jnp.pad(bias_b, ((0, 0), (0, pad))).reshape(B, 1, O_pad)
    else:
        w_lin_p = w_lin_bf16
        bias_p = bias_b.reshape(B, 1, O_pad)

    x_itemsize = jnp.dtype(x.dtype).itemsize
    out_itemsize = jnp.dtype(out_dtype).itemsize
    TQ = _pick_token_tile(T, B, H, O_pad, x_itemsize, out_itemsize)
    grid = (B, pl.cdiv(T, TQ))

    vmem_need = (2 * TQ * H * x_itemsize + 2 * TQ * O_pad * out_itemsize
                 + 2 * H * O_pad * 2 + 2 * H * 4 + 2 * O_pad * 4)
    vmem_limit = int(min(max(vmem_need * 3 // 2 + (2 << 20), 32 << 20), 64 << 20))

    cost = pl.CostEstimate(
        flops=2 * B * T * H * O_pad,
        transcendentals=0,
        bytes_accessed=(x.size * x_itemsize
                        + B * T * O_pad * out_itemsize
                        + w_lin_p.size * 2 + bias_p.size * 4 + scale1.size * 4),
    )

    out = pl.pallas_call(
        final_layer_kernel,
        out_shape=jax.ShapeDtypeStruct((B, T, O_pad), out_dtype),
        grid_spec=pltpu.PrefetchScalarGridSpec(
            num_scalar_prefetch=0,
            grid=grid,
            in_specs=[
                pl.BlockSpec((1, TQ, H), lambda b, t: (b, t, 0)),       # x tile
                pl.BlockSpec((1, 1, H), lambda b, t: (b, 0, 0)),        # 1 + scale (per batch)
                pl.BlockSpec((H, O_pad), lambda b, t: (0, 0)),          # final weight (bf16)
                pl.BlockSpec((1, 1, O_pad), lambda b, t: (b, 0, 0)),    # fused bias (f32)
            ],
            out_specs=pl.BlockSpec((1, TQ, O_pad), lambda b, t: (b, t, 0)),
        ),
        compiler_params=pltpu.CompilerParams(
            dimension_semantics=("parallel", "parallel"),
            vmem_limit_bytes=vmem_limit),
        cost_estimate=cost,
    )(x, scale1, w_lin_p, bias_p)

    if pad:
        # TODO(synk): consumers (e.g. DiT unpatchify) could take the padded
        # (B, T, O_pad) array directly and avoid this extra HBM round trip.
        return out[..., :O]
    return out


def final_layer_ref(x, c, w_mod, b_mod, w_lin, b_lin):
    """Pure-JAX (f32) reference mirroring the PyTorch forward."""
    silu_c = c * jax.nn.sigmoid(c)
    mod = silu_c @ w_mod + b_mod
    H = x.shape[-1]
    shift, scale = mod[:, :H], mod[:, H:]
    mean = jnp.mean(x, axis=-1, keepdims=True)
    var = jnp.mean(jnp.square(x - mean), axis=-1, keepdims=True)
    x_n = (x - mean) / jnp.sqrt(var + 1e-6)
    x_m = x_n * (1.0 + scale[:, None, :]) + shift[:, None, :]
    return x_m @ w_lin + b_lin


if __name__ == "__main__":
    # Module hyperparameters (small, consistent with FinalLayer's __init__)
    hidden_size = 32
    patch_size = 4
    out_channels = 8
    out_dim = patch_size * out_channels          # 32
    B, T = 2, 8

    key = jax.random.PRNGKey(0)
    kx, kc, k1, k2, k3, k4 = jax.random.split(key, 6)

    x = jax.random.normal(kx, (B, T, hidden_size), dtype=jnp.float32)
    c = jax.random.normal(kc, (B, hidden_size), dtype=jnp.float32)

    # Deterministic parameter init (nn.Linear shapes transposed to (in, out))
    w_mod = 0.02 * jax.random.normal(k1, (hidden_size, 2 * hidden_size), dtype=jnp.float32)
    b_mod = 0.01 * jax.random.normal(k2, (2 * hidden_size,), dtype=jnp.float32)
    w_lin = 0.02 * jax.random.normal(k3, (hidden_size, out_dim), dtype=jnp.float32)
    b_lin = 0.01 * jax.random.normal(k4, (out_dim,), dtype=jnp.float32)

    out = final_layer(x, c, w_mod, b_mod, w_lin, b_lin)
    out = jax.block_until_ready(out)

    ref = final_layer_ref(x, c, w_mod, b_mod, w_lin, b_lin)
    assert out.shape == (B, T, out_dim)
    # Looser tolerance because the final matmul feeds the MXU bf16 operands
    # (f32 accumulation); LayerNorm/modulate stay in f32.
    assert jnp.allclose(out, ref, atol=1e-2, rtol=1e-2), "mismatch vs reference"

    print("KERNEL_OK")
</pallas_src>

<mosaic_0001>
module attributes {stable_mosaic.version = 11 : i64} {
  func.func @final_layer_kernel(%arg0: i32, %arg1: i32, %arg2: memref<1x8x32xf32, #tpu.memory_space<vmem>>, %arg3: memref<1x1x32xf32, #tpu.memory_space<vmem>>, %arg4: memref<32x128xbf16, #tpu.memory_space<vmem>>, %arg5: memref<1x1x128xf32, #tpu.memory_space<vmem>>, %arg6: memref<1x8x128xf32, #tpu.memory_space<vmem>>) attributes {dimension_semantics = [#tpu.dimension_semantics<parallel>, #tpu.dimension_semantics<parallel>], iteration_bounds = array<i64: 2, 1>, scalar_prefetch = 0 : i64, scratch_operands = 0 : i64, tpu.core_type = #tpu.core_type<tc>, window_params = [{transform_indices = @transform_0, window_bounds = array<i64: 1, 8, 32>}, {transform_indices = @transform_1, window_bounds = array<i64: 1, 1, 32>}, {pipeline_mode = #tpu.pipeline_mode<synchronous>, transform_indices = @transform_2, window_bounds = array<i64: 32, 128>}, {transform_indices = @transform_3, window_bounds = array<i64: 1, 1, 128>}, {transform_indices = @transform_4, window_bounds = array<i64: 1, 8, 128>}]} {
    %c0 = arith.constant 0 : index
    %c0_0 = arith.constant 0 : index
    %c0_1 = arith.constant 0 : index
    %0 = vector.load %arg2[%c0, %c0_0, %c0_1] : memref<1x8x32xf32, #tpu.memory_space<vmem>>, vector<1x8x32xf32>
    %1 = vector.shape_cast %0 : vector<1x8x32xf32> to vector<8x32xf32>
    %cst = arith.constant dense<0.000000e+00> : vector<8xf32>
    %2 = vector.multi_reduction <add>, %1, %cst [1] : vector<8x32xf32> to vector<8xf32>
    %3 = vector.shape_cast %2 : vector<8xf32> to vector<8x1xf32>
    %cst_2 = arith.constant 3.125000e-02 : f32
    %4 = vector.broadcast %cst_2 : f32 to vector<8x1xf32>
    %5 = arith.mulf %3, %4 : vector<8x1xf32>
    %6 = vector.broadcast %5 : vector<8x1xf32> to vector<8x32xf32>
    %7 = arith.subf %1, %6 : vector<8x32xf32>
    %8 = arith.mulf %7, %7 : vector<8x32xf32>
    %cst_3 = arith.constant dense<0.000000e+00> : vector<8xf32>
    %9 = vector.multi_reduction <add>, %8, %cst_3 [1] : vector<8x32xf32> to vector<8xf32>
    %10 = vector.shape_cast %9 : vector<8xf32> to vector<8x1xf32>
    %cst_4 = arith.constant 3.125000e-02 : f32
    %11 = vector.broadcast %cst_4 : f32 to vector<8x1xf32>
    %12 = arith.mulf %10, %11 : vector<8x1xf32>
    %cst_5 = arith.constant 9.99999997E-7 : f32
    %13 = vector.broadcast %cst_5 : f32 to vector<8x1xf32>
    %14 = arith.addf %12, %13 : vector<8x1xf32>
    %15 = math.rsqrt %14 : vector<8x1xf32>
    %16 = vector.broadcast %15 : vector<8x1xf32> to vector<8x32xf32>
    %17 = arith.mulf %7, %16 : vector<8x32xf32>
    %c0_6 = arith.constant 0 : index
    %c0_7 = arith.constant 0 : index
    %c0_8 = arith.constant 0 : index
    %18 = vector.load %arg3[%c0_6, %c0_7, %c0_8] : memref<1x1x32xf32, #tpu.memory_space<vmem>>, vector<1x1x32xf32>
    %19 = vector.shape_cast %18 : vector<1x1x32xf32> to vector<1x32xf32>
    %20 = vector.broadcast %19 : vector<1x32xf32> to vector<8x32xf32>
    %21 = arith.mulf %17, %20 : vector<8x32xf32>
    %22 = arith.truncf %21 : vector<8x32xf32> to vector<8x32xbf16>
    %c0_9 = arith.constant 0 : index
    %c0_10 = arith.constant 0 : index
    %23 = vector.load %arg4[%c0_9, %c0_10] : memref<32x128xbf16, #tpu.memory_space<vmem>>, vector<32x128xbf16>
    %cst_11 = arith.constant dense<0.000000e+00> : vector<8x128xf32>
    %24 = tpu.matmul %22, %23, %cst_11 {dimension_numbers = #tpu.dot_dimension_numbers<[1], [0], [0], [1], [0, 0, 1, 1], [], []>} : vector<8x32xbf16>, vector<32x128xbf16>, vector<8x128xf32> -> vector<8x128xf32>
    %c0_12 = arith.constant 0 : index
    %c0_13 = arith.constant 0 : index
    %c0_14 = arith.constant 0 : index
    %25 = vector.load %arg5[%c0_12, %c0_13, %c0_14] : memref<1x1x128xf32, #tpu.memory_space<vmem>>, vector<1x1x128xf32>
    %26 = vector.shape_cast %25 : vector<1x1x128xf32> to vector<1x128xf32>
    %27 = vector.broadcast %26 : vector<1x128xf32> to vector<8x128xf32>
    %28 = arith.addf %24, %27 : vector<8x128xf32>
    %c0_15 = arith.constant 0 : index
    %c0_16 = arith.constant 0 : index
    %c0_17 = arith.constant 0 : index
    %29 = vector.load %arg6[%c0_15, %c0_16, %c0_17] : memref<1x8x128xf32, #tpu.memory_space<vmem>>, vector<1x8x128xf32>
    %30 = vector.shape_cast %29 : vector<1x8x128xf32> to vector<8x128xf32>
    %31 = vector.shape_cast %28 : vector<8x128xf32> to vector<1x8x128xf32>
    tpu.vector_store %arg6[%c0_15, %c0_16, %c0_17], %31 {strides = array<i32>} : memref<1x8x128xf32, #tpu.memory_space<vmem>>, vector<1x8x128xf32>,
    return
  }
  func.func @transform_0(%arg0: i32, %arg1: i32) -> (i32, i32, i32) {
    %c0_i32 = arith.constant 0 : i32
    %c0_i32_0 = arith.constant 0 : i32
    return %arg0, %arg1, %c0_i32 : i32, i32, i32
  }
  func.func @transform_1(%arg0: i32, %arg1: i32) -> (i32, i32, i32) {
    %c0_i32 = arith.constant 0 : i32
    %c0_i32_0 = arith.constant 0 : i32
    %c0_i32_1 = arith.constant 0 : i32
    return %arg0, %c0_i32, %c0_i32_0 : i32, i32, i32
  }
  func.func @transform_2(%arg0: i32, %arg1: i32) -> (i32, i32) {
    %c0_i32 = arith.constant 0 : i32
    %c0_i32_0 = arith.constant 0 : i32
    %c0_i32_1 = arith.constant 0 : i32
    return %c0_i32, %c0_i32_0 : i32, i32
  }
  func.func @transform_3(%arg0: i32, %arg1: i32) -> (i32, i32, i32) {
    %c0_i32 = arith.constant 0 : i32
    %c0_i32_0 = arith.constant 0 : i32
    %c0_i32_1 = arith.constant 0 : i32
    return %arg0, %c0_i32, %c0_i32_0 : i32, i32, i32
  }
  func.func @transform_4(%arg0: i32, %arg1: i32) -> (i32, i32, i32) {
    %c0_i32 = arith.constant 0 : i32
    %c0_i32_0 = arith.constant 0 : i32
    return %arg0, %arg1, %c0_i32 : i32, i32, i32
  }
}

</mosaic_0001>

<llo_original>
// kernel: tpu_custom_call.1
$region0: #{tpu_custom_call.1}
  #allocation0 [shape = 'u32[]', space=smem, size = 0x4, offset = 0x4, fixed_abs, tag = 'smem constant byte address 0x4 - core index']
  #allocation1 [shape = 'u32[144,128]{1,0:T(1,128)}', space=vmem, size = 0x12000, scoped, tag = 'internal scratch']
  %s0 = inlined_call_operand.hbm [shape: f32[2,8,32], index: 0, kind: input, shape index: {}]
  %s1 = inlined_call_operand.vmem [shape: f32[2,1,32], index: 1, kind: input, shape index: {}]
  %s2 = inlined_call_operand.hbm [shape: bf16[32,128], index: 2, kind: input, shape index: {}]
  %s3 = inlined_call_operand.vmem [shape: f32[2,1,128], index: 3, kind: input, shape index: {}]
  %s4 = inlined_call_operand.hbm [shape: f32[2,8,128], index: 4, kind: output, shape index: {}]
  %s5 = sld [smem:[#allocation0]]
  $region57: #{tpu_custom_call.1} parent=0
    _
  %s7 = ssub.s32 1, %s5
  %s8 = scalar_select 0, %s7, %s5
  $region1: #{tpu_custom_call.1} parent=0
    #allocation2 [shape = 'u8[8192]{0}', space=vmem, size = 0x2000, scoped, tag = 'input window, operand 0']
    #allocation3 [shape = 's32[2]{0}', space=sflag, size = 0x8, scoped, tag = 'scoped memory for tpu_custom_call.1']
    #allocation4 [shape = 's32[2]{0}', space=sflag, size = 0x8, scoped, tag = 'scoped memory for tpu_custom_call.1']
    #allocation5 [shape = 'u8[8192]{0}', space=vmem, size = 0x2000, scoped, tag = 'input window, operand 2, single buffered']
    #allocation6 [shape = 's32[1]{0}', space=sflag, size = 0x4, scoped, tag = 'scoped memory for tpu_custom_call.1']
    #allocation7 [shape = 'u8[8192]{0}', space=vmem, size = 0x2000, scoped, tag = 'output window, operand 0']
    %9 = vsyncpa [#allocation3], 0
    %s10 = scalar_lea.sflag [#allocation3], 1
    %11 = vsyncpa %s10, 0
    %12 = vsyncpa [#allocation6], 0
    %13 = vsyncpa [#allocation4], 0
    %s14 = scalar_lea.sflag [#allocation4], 1
    %15 = vsyncpa %s14, 0
    loop: start=0, step=1, limit=4
    $region2: #{tpu_custom_call.1} parent=1 // loop_pre_header
      _
    $region3: #{tpu_custom_call.1} parent=1 // loop_header
      %s17 = sphi 0, %s21
      %p18 = scmp.ge.s32.totalorder %s17, 4
      %s24 = sphi 0, %s36
      %s25 = sphi 0, %s32
      %s26 = sphi 0, %s24
      %s27 = sphi 0, %s25
      %s28 = sphi 0, %s26
      %s29 = sphi 0, %s27
      %s41 = sphi 0, %s43
      %s44 = sphi 0, %s41
      %s45 = sphi 0, %s44
      %s61 = sphi 0, %s45
      %s67 = sphi 0, %s69
      %s70 = sphi 0, %s67
      %s71 = sphi 0, %s70
      %s87 = sphi 0, %s71
      %s91 = sphi 0, %s91
      %s93 = sphi 0, %s91
      %s94 = sphi 0, %s93
      %s108 = sphi 0, %s94
      %s114 = sphi 0, %s116
      %s117 = sphi 0, %s114
      %s118 = sphi 0, %s117
      %s134 = sphi 0, %s118
      %s142 = sphi 0, %s144
      %s145 = sphi 0, %s142
      %s146 = sphi 0, %s145
      %s162 = sphi 0, %s146
    $region4: #{tpu_custom_call.1} parent=1 // loop_header_branch
      %20 = sbr.rel (%p18) target = $region8
    $region5: #{tpu_custom_call.1} parent=1 // loop_body
      %s22 = ssub.s32 %s17, 1
      %s23 = ssub.s32 %s17, 2
      %s30 = sadd.s32 1, %s25
      %p31 = scmp.ge.s32.totalorder %s30, 1
      %s32 = scalar_select %p31, 0, %s30
      %s33 = sadd.s32 1, %s24
      %s34 = scalar_select %p31, %s33, %s24
      %p35 = scmp.ge.s32.totalorder %s34, 2
      %s36 = scalar_select %p35, 0, %s34
      %s37 = ssub.s32 %s24, %s36
      %s38 = ssub.s32 %s25, %s32
      %s39 = sor.u32 %s37, %s38
      %p40 = scmp.eq.s32.totalorder %s39, 0
      %s42 = sadd.s32 %s41, 1
      %s43 = scalar_select %p40, %s41, %s42
      %p46 = pneg %p40
      %p47 = scmp.eq.s32.totalorder %s17, 1
      %p48 = por %p46, %p47
      %p49 = scmp.ne.s32.totalorder %s41, %s44
      %p50 = scmp.eq.s32.totalorder %s17, 0
      %p51 = por %p49, %p50
      %p52 = scmp.ne.s32.totalorder %s41, %s44
      %p53 = scmp.eq.s32.totalorder %s22, 1
      %p54 = por %p52, %p53
      %p55 = scmp.ne.s32.totalorder %s44, %s45
      %p56 = scmp.eq.s32.totalorder %s22, 0
      %p57 = por %p55, %p56
      %p58 = scmp.ne.s32.totalorder %s44, %s45
      %p59 = scmp.eq.s32.totalorder %s23, 1
      %p60 = por %p58, %p59
      %p62 = scmp.ne.s32.totalorder %s45, %s61
      %p63 = scmp.eq.s32.totalorder %s23, 0
      %p64 = por %p62, %p63
      %s65 = ssub.s32 %s24, %s36
      %p66 = scmp.eq.s32.totalorder %s65, 0
      %s68 = sadd.s32 %s67, 1
      %s69 = scalar_select %p66, %s67, %s68
      %p72 = pneg %p66
      %p73 = scmp.eq.s32.totalorder %s17, 1
      %p74 = por %p72, %p73
      %p75 = scmp.ne.s32.totalorder %s67, %s70
      %p76 = scmp.eq.s32.totalorder %s17, 0
      %p77 = por %p75, %p76
      %p78 = scmp.ne.s32.totalorder %s67, %s70
      %p79 = scmp.eq.s32.totalorder %s22, 1
      %p80 = por %p78, %p79
      %p81 = scmp.ne.s32.totalorder %s70, %s71
      %p82 = scmp.eq.s32.totalorder %s22, 0
      %p83 = por %p81, %p82
      %p84 = scmp.ne.s32.totalorder %s70, %s71
      %p85 = scmp.eq.s32.totalorder %s23, 1
      %p86 = por %p84, %p85
      %p88 = scmp.ne.s32.totalorder %s71, %s87
      %p89 = scmp.eq.s32.totalorder %s23, 0
      %p90 = por %p88, %p89
      %s92 = sadd.s32 %s91, 1
      %p95 = scmp.eq.s32.totalorder %s17, 1
      %p96 = scmp.ne.s32.totalorder %s91, %s93
      %p97 = scmp.eq.s32.totalorder %s17, 0
      %p98 = por %p96, %p97
      %p99 = scmp.ne.s32.totalorder %s91, %s93
      %p100 = scmp.eq.s32.totalorder %s22, 1
      %p101 = por %p99, %p100
      %p102 = scmp.ne.s32.totalorder %s93, %s94
      %p103 = scmp.eq.s32.totalorder %s22, 0
      %p104 = por %p102, %p103
      %p105 = scmp.ne.s32.totalorder %s93, %s94
      %p106 = scmp.eq.s32.totalorder %s23, 1
      %p107 = por %p105, %p106
      %p109 = scmp.ne.s32.totalorder %s94, %s108
      %p110 = scmp.eq.s32.totalorder %s23, 0
      %p111 = por %p109, %p110
      %s112 = ssub.s32 %s24, %s36
      %p113 = scmp.eq.s32.totalorder %s112, 0
      %s115 = sadd.s32 %s114, 1
      %s116 = scalar_select %p113, %s114, %s115
      %p119 = pneg %p113
      %p120 = scmp.eq.s32.totalorder %s17, 1
      %p121 = por %p119, %p120
      %p122 = scmp.ne.s32.totalorder %s114, %s117
      %p123 = scmp.eq.s32.totalorder %s17, 0
      %p124 = por %p122, %p123
      %p125 = scmp.ne.s32.totalorder %s114, %s117
      %p126 = scmp.eq.s32.totalorder %s22, 1
      %p127 = por %p125, %p126
      %p128 = scmp.ne.s32.totalorder %s117, %s118
      %p129 = scmp.eq.s32.totalorder %s22, 0
      %p130 = por %p128, %p129
      %p131 = scmp.ne.s32.totalorder %s117, %s118
      %p132 = scmp.eq.s32.totalorder %s23, 1
      %p133 = por %p131, %p132
      %p135 = scmp.ne.s32.totalorder %s118, %s134
      %p136 = scmp.eq.s32.totalorder %s23, 0
      %p137 = por %p135, %p136
      %s138 = ssub.s32 %s24, %s36
      %s139 = ssub.s32 %s25, %s32
      %s140 = sor.u32 %s138, %s139
      %p141 = scmp.eq.s32.totalorder %s140, 0
      %s143 = sadd.s32 %s142, 1
      %s144 = scalar_select %p141, %s142, %s143
      %p147 = pneg %p141
      %p148 = scmp.eq.s32.totalorder %s17, 1
      %p149 = por %p147, %p148
      %p150 = scmp.ne.s32.totalorder %s142, %s145
      %p151 = scmp.eq.s32.totalorder %s17, 0
      %p152 = por %p150, %p151
      %p153 = scmp.ne.s32.totalorder %s142, %s145
      %p154 = scmp.eq.s32.totalorder %s22, 1
      %p155 = por %p153, %p154
      %p156 = scmp.ne.s32.totalorder %s145, %s146
      %p157 = scmp.eq.s32.totalorder %s22, 0
      %p158 = por %p156, %p157
      %p159 = scmp.ne.s32.totalorder %s145, %s146
      %p160 = scmp.eq.s32.totalorder %s23, 1
      %p161 = por %p159, %p160
      %p163 = scmp.ne.s32.totalorder %s146, %s162
      %p164 = scmp.eq.s32.totalorder %s23, 0
      %p165 = por %p163, %p164
      %p166 = scmp.le.s32.totalorder 1, %s17
      %p167 = scmp.lt.s32.totalorder %s17, 3
      %p168 = pnand %p166, %p167
      %p169 = pneg %p168
      // Predicated region
      $region9: #{tpu_custom_call.1} parent=5 // pred_check
        _
      $region10: #{tpu_custom_call.1} parent=5 // pred_check_branch
        %171 = sbr.rel (%p168) target = $region12
      $region11: #{tpu_custom_call.1} parent=5 // pred_region
        %s172 = ssub.s32 %s17, 1
        // Predicated region
        $region13: #{tpu_custom_call.1} parent=11 // pred_check
          %p173 = pneg %p104
        $region14: #{tpu_custom_call.1} parent=11 // pred_check_branch
          %175 = sbr.rel (%p173) target = $region16
        $region15: #{tpu_custom_call.1} parent=11 // pred_region
          %s177 = ssub.s32 256, 256
          %178 = vsyncadd [#allocation6], %s177
          %s179 = sshll.u32 [#allocation5], 4
          %s180 = int_to_ptr.vmem [resolvable:$true] %s179
          %185 = dma.hbm_to_vmem [thread:$0]  %s2, 256, %s180, [#allocation6], 64, 64, 4
        $region16: #{tpu_custom_call.1} parent=11 // pred_fallthru
          _
      $region12: #{tpu_custom_call.1} parent=5 // pred_fallthru
        _
      %p186 = scmp.lt.s32.totalorder %s17, 2
      // Predicated region
      $region17: #{tpu_custom_call.1} parent=5 // pred_check
        %p187 = pneg %p186
      $region18: #{tpu_custom_call.1} parent=5 // pred_check_branch
        %189 = sbr.rel (%p187) target = $region20
      $region19: #{tpu_custom_call.1} parent=5 // pred_region
        // Predicated region
        $region21: #{tpu_custom_call.1} parent=19 // pred_check
          %p190 = pneg %p51
        $region22: #{tpu_custom_call.1} parent=19 // pred_check_branch
          %192 = sbr.rel (%p190) target = $region24
        $region23: #{tpu_custom_call.1} parent=19 // pred_region
          %s193 = sand.u32 %s41, 1
          %s194 = scalar_lea.sflag [#allocation3], %s193
          %s195 = sand.u32 %s41, 1
          %s196 = smul.addr %s195, 8
          %s197 = scalar_lea.vmem [#allocation2], %s196
          %s199 = ssub.s32 128, 128
          %200 = vsyncadd %s194, %s199
          %s201 = sadd.s32 %s25, %s24
          %s202 = smul.addr %s201, 128
          %s203 = scalar_lea.hbm %s0, %s202
          %s205 = sshll.u32 %s197, 4
          %s206 = int_to_ptr.vmem [resolvable:$true] %s205
          %208 = dma.hbm_to_vmem [thread:$0]  %s203, 128, %s206, %s194
        $region24: #{tpu_custom_call.1} parent=19 // pred_fallthru
          _
        // Predicated region
        $region25: #{tpu_custom_call.1} parent=19 // pred_check
          %p209 = pneg %p77
        $region26: #{tpu_custom_call.1} parent=19 // pred_check_branch
          %211 = sbr.rel (%p209) target = $region28
        $region27: #{tpu_custom_call.1} parent=19 // pred_region
          %p212 = scmp.lt.s32.totalorder %s24, 1
          %s213 = scalar_select %p212, %s24, 1
          %s214 = scalar_lea.vmem %s1, %s213
        $region28: #{tpu_custom_call.1} parent=19 // pred_fallthru
          _
        // Predicated region
        $region29: #{tpu_custom_call.1} parent=19 // pred_check
          %p215 = pneg %p124
        $region30: #{tpu_custom_call.1} parent=19 // pred_check_branch
          %217 = sbr.rel (%p215) target = $region32
        $region31: #{tpu_custom_call.1} parent=19 // pred_region
          %p218 = scmp.lt.s32.totalorder %s24, 1
          %s219 = scalar_select %p218, %s24, 1
          %s220 = scalar_lea.vmem %s3, %s219
        $region32: #{tpu_custom_call.1} parent=19 // pred_fallthru
          _
      $region20: #{tpu_custom_call.1} parent=5 // pred_fallthru
        _
      %p221 = scmp.le.s32.totalorder 1, %s17
      %p222 = scmp.lt.s32.totalorder %s17, 3
      %p223 = pnand %p221, %p222
      %p224 = pneg %p223
      // Predicated region
      $region33: #{tpu_custom_call.1} parent=5 // pred_check
        _
      $region34: #{tpu_custom_call.1} parent=5 // pred_check_branch
        %226 = sbr.rel (%p223) target = $region36
      $region35: #{tpu_custom_call.1} parent=5 // pred_region
        %s227 = ssub.s32 %s17, 1
        %s228 = sand.u32 %s44, 1
        %s229 = scalar_lea.sflag [#allocation3], %s228
        %s230 = sand.u32 %s44, 1
        %s231 = smul.addr %s230, 8
        %s232 = scalar_lea.vmem [#allocation2], %s231
        // Predicated region
        $region37: #{tpu_custom_call.1} parent=35 // pred_check
          %p233 = pneg %p57
        $region38: #{tpu_custom_call.1} parent=35 // pred_check_branch
          %235 = sbr.rel (%p233) target = $region40
        $region39: #{tpu_custom_call.1} parent=35 // pred_region
          %236 = dma.done %s229, 128
        $region40: #{tpu_custom_call.1} parent=35 // pred_fallthru
          _
        // Predicated region
        $region41: #{tpu_custom_call.1} parent=35 // pred_check
          %p237 = pneg %p104
        $region42: #{tpu_custom_call.1} parent=35 // pred_check_branch
          %239 = sbr.rel (%p237) target = $region44
        $region43: #{tpu_custom_call.1} parent=35 // pred_region
          %240 = dma.done [#allocation6], 256
        $region44: #{tpu_custom_call.1} parent=35 // pred_fallthru
          _
        %s241 = sand.u32 %s44, 1
        %s242 = scalar_lea.sflag [#allocation3], %s241
        %s243 = sand.u32 %s44, 1
        %s244 = smul.addr %s243, 8
        %s245 = scalar_lea.vmem [#allocation2], %s244
        %p246 = pneg %p57
        %p247 = pneg %p54
        %p248 = scmp.lt.s32.totalorder %s26, 1
        %s249 = scalar_select %p248, %s26, 1
        %s250 = scalar_lea.vmem %s1, %s249
        %p251 = pneg %p83
        %p252 = pneg %p80
        %p253 = pneg %p104
        %p254 = pneg %p101
        %p255 = scmp.lt.s32.totalorder %s26, 1
        %s256 = scalar_select %p255, %s26, 1
        %s257 = scalar_lea.vmem %s3, %s256
        %p258 = pneg %p130
        %p259 = pneg %p127
        %p260 = pneg %p158
        %p261 = pneg %p155
        %s262 = sand.u32 %s145, 1
        %s263 = scalar_lea.sflag [#allocation4], %s262
        %s264 = sand.u32 %s145, 1
        %s265 = smul.addr %s264, 8
        %s266 = scalar_lea.vmem [#allocation7], %s265
        %p267 = scmp.lt.s32.totalorder %s26, 1
        %s268 = scalar_select %p267, %s26, 1
        %s269 = scalar_lea.vmem %s1, %s268
        %p270 = scmp.lt.s32.totalorder %s26, 1
        %s271 = scalar_select %p270, %s26, 1
        %s272 = scalar_lea.vmem %s3, %s271
        %v274 = vld [vmem:[%s232] sm:$0xff]
        %vm275 = vcmask 261120
        %v276 = vsel %vm275, %v274, 0.0
        %277 = vadd.xlane.f32.xlu0 %v276
        %v278 = vpop.xlane.xlu0 %277
        %v279 = vmul.f32 %v278, 0.03125
        %v280 = vsub.f32 %v274, %v279
        %v281 = vmul.f32 %v280, %v280
        %v282 = vsel %vm275, %v281, 0.0
        %283 = vadd.xlane.f32.xlu0 %v282
        %v284 = vpop.xlane.xlu0 %283
        %v285 = vmul.f32 %v284, 0.03125
        %v286 = vadd.f32 %v285, 1e-06
        %v287 = vrsqrt.pop %v286
        %v288 = vmul.f32 %v280, %v287
        %v289 = vld [vmem:[%s269] sm:$0x1]
        %v291 = vlaneseq
        %v292 = vshrl.u32 %v291, 7
        %v293 = vsub.s32 0, %v292
        %v294 = vrot.slane %v289, %v293
        %v296 = vmul.f32 %v288, %v294
        %v297 = vpack.c.bf16 %v296, %v296
        %v298 = vld [vmem:[#allocation5] sm:$0xf]
        %v299 = vld [vmem:[#allocation5 + $0x4] sm:$0xf]
        %v300 = vld [vmem:[#allocation5 + $0x8] sm:$0xf]
        %v301 = vld [vmem:[#allocation5 + $0xc] sm:$0xf]
        %v302 = vld [vmem:[%s272] sm:$0x1]
        %v304 = vlaneseq
        %v305 = vshrl.u32 %v304, 7
        %v306 = vsub.s32 0, %v305
        %v307 = vrot.slane %v302, %v306
        %v313 = vunpack.c.l.b16 %v298
        %v314 = vunpack.c.l.b16 %v299
        %v315 = vunpack.c.l.b16 %v300
        %v316 = vunpack.c.l.b16 %v301
        %v317 = vpack.c.b16 %v314, %v313
        %v318 = vpack.c.b16 %v316, %v315
        %v322 = vsel %vm275, %v297, 0
        %324 = vmatprep.subr.bf16.mxu0 0
        %325 = vmatpush1.bf16.msra.mxu0 %v317
        %326 = vmatprep.subr.bf16.mxu0 0
        %327 = vmatpush1.bf16.msra.mxu0 %v318
        %328 = vmatprep.subr.bf16.mxu0 0
        %329 = vmatpush1.bf16.msra.mxu0 0
        %330 = vmatprep.subr.bf16.mxu0 0
        %331 = vmatpush1.bf16.msra.mxu0 0
        %332 = vmatprep.subr.bf16.mxu0 0
        %333 = vmatpush1.bf16.msra.mxu0 0
        %334 = vmatprep.subr.bf16.mxu0 0
        %335 = vmatpush1.bf16.msra.mxu0 0
        %336 = vmatprep.subr.bf16.mxu0 0
        %337 = vmatpush1.bf16.msra.mxu0 0
        %338 = vmatprep.subr.bf16.mxu0 0
        %339 = vmatpush1.bf16.msra.mxu0 0
        %340 = vmatprep.subr.bf16.mxu0 0
        %341 = vmatpush1.bf16.msra.mxu0 0
        %342 = vmatprep.subr.bf16.mxu0 0
        %343 = vmatpush1.bf16.msra.mxu0 0
        %344 = vmatprep.subr.bf16.mxu0 0
        %345 = vmatpush1.bf16.msra.mxu0 0
        %346 = vmatprep.subr.bf16.mxu0 0
        %347 = vmatpush1.bf16.msra.mxu0 0
        %348 = vmatprep.subr.bf16.mxu0 0
        %349 = vmatpush1.bf16.msra.mxu0 0
        %350 = vmatprep.subr.bf16.mxu0 0
        %351 = vmatpush1.bf16.msra.mxu0 0
        %352 = vmatprep.subr.bf16.mxu0 0
        %353 = vmatpush1.bf16.msra.mxu0 0
        %354 = vmatprep.subr.bf16.mxu0 0
        %355 = vmatpush1.bf16.msra.mxu0 0
        %356 = vmatprep.mubr.bf16.mxu0 0
        %357 = vmatmul.mubr.bf16.gmra.mrb[0].mxu0 %v322
        %v358 = vpop.f32.mrb[0].mxu0
        %v359 = vadd.f32 %v307, %v358
        %v360 = vpop.f32.mrb[0].mxu0
        %v361 = vpop.f32.mrb[0].mxu0
        %v362 = vpop.f32.mrb[0].mxu0
        %363 = vdwg.mxu0
        %364 = vst [vmem:[%s266] sm:$0xff] %v359
        %s365 = sand.u32 %s145, 1
        %s366 = scalar_lea.sflag [#allocation4], %s365
        %s367 = sand.u32 %s145, 1
        %s368 = smul.addr %s367, 8
        %s369 = scalar_lea.vmem [#allocation7], %s368
        // Predicated region
        $region45: #{tpu_custom_call.1} parent=35 // pred_check
          %p370 = pneg %p155
        $region46: #{tpu_custom_call.1} parent=35 // pred_check_branch
          %372 = sbr.rel (%p370) target = $region48
        $region47: #{tpu_custom_call.1} parent=35 // pred_region
          %s374 = ssub.s32 128, 128
          %375 = vsyncadd %s366, %s374
          %s376 = sadd.s32 %s27, %s26
          %s377 = smul.addr %s376, 128
          %s378 = scalar_lea.hbm %s4, %s377
          %s380 = sshll.u32 %s369, 4
          %s381 = int_to_ptr.vmem [resolvable:$true] %s380
          %383 = dma.vmem_to_hbm [thread:$0]  %s381, 128, %s378, %s366
        $region48: #{tpu_custom_call.1} parent=35 // pred_fallthru
          _
      $region36: #{tpu_custom_call.1} parent=5 // pred_fallthru
        _
      %p384 = scmp.le.s32.totalorder 2, %s17
      // Predicated region
      $region49: #{tpu_custom_call.1} parent=5 // pred_check
        %p385 = pneg %p384
      $region50: #{tpu_custom_call.1} parent=5 // pred_check_branch
        %387 = sbr.rel (%p385) target = $region52
      $region51: #{tpu_custom_call.1} parent=5 // pred_region
        %s388 = ssub.s32 %s17, 2
        // Predicated region
        $region53: #{tpu_custom_call.1} parent=51 // pred_check
          %p389 = pneg %p161
        $region54: #{tpu_custom_call.1} parent=51 // pred_check_branch
          %391 = sbr.rel (%p389) target = $region56
        $region55: #{tpu_custom_call.1} parent=51 // pred_region
          %s392 = sand.u32 %s146, 1
          %s393 = scalar_lea.sflag [#allocation4], %s392
          %s394 = sand.u32 %s146, 1
          %s395 = smul.addr %s394, 8
          %s396 = scalar_lea.vmem [#allocation7], %s395
          %397 = dma.done %s393, 128
        $region56: #{tpu_custom_call.1} parent=51 // pred_fallthru
          _
      $region52: #{tpu_custom_call.1} parent=5 // pred_fallthru
        _
    $region6: #{tpu_custom_call.1} parent=1 // loop_footer
      %s21 = sadd.s32 1, %s17
    $region7: #{tpu_custom_call.1} parent=1 // loop_footer_branch
      %16 = sbr.rel target = $region3
    $region8: #{tpu_custom_call.1} parent=1 // loop_exit
      _
    %398 = vsyncpa [#allocation3], 1
    %s399 = scalar_lea.sflag [#allocation3], 1
    %400 = vsyncpa %s399, 1
    %401 = vsyncpa [#allocation6], 1
    %402 = vsyncpa [#allocation4], 1
    %s403 = scalar_lea.sflag [#allocation4], 1
    %404 = vsyncpa %s403, 1

</llo_original>
